<compile_context>
chip_gen: v7x
topology: tpu7x:2x2x1
jax: 0.10.0
libtpu: 0.0.40
codegen_flags: <defaults>
</compile_context>

<pallas_src>
import jax
import jax.numpy as jnp
from jax.experimental import pallas as pl
from jax.experimental.pallas import tpu as pltpu

_LANE = 128        # vreg lane width (last dim)
_BATCH_UNIT = 16   # bf16 packs 16 sublanes per vreg -> round batch tiles to 16


def _round_up(v, m):
    return ((v + m - 1) // m) * m


def _pick_batch_tile(batch, max_tile):
    """Return (tile, padded_batch): tile a multiple of 16, >=2 grid steps when possible."""
    b_pad = _round_up(batch, _BATCH_UNIT)
    if b_pad <= _BATCH_UNIT:
        return b_pad, b_pad                        # too small to split across cores
    n_steps = max(2, pl.cdiv(b_pad, max_tile))     # >=2 so v7x's 2nd TensorCore is used
    tb = _round_up(pl.cdiv(b_pad, n_steps), _BATCH_UNIT)
    return tb, tb * n_steps


def _vmem_limit_bytes(requested):
    """Clamp the scoped-VMEM request to 85% of the chip's actual VMEM capacity."""
    cap = 64 << 20                                 # conservative default: v7x per-TC VMEM
    get_info = getattr(pltpu, "get_tpu_info", None)
    if get_info is not None:
        try:
            cap = int(get_info().vmem_capacity_bytes)
        except Exception:  # not on a TPU backend / emulator: keep conservative default
            pass
    return int(min(max(requested, 32 << 20), int(0.85 * cap)))


def prepare_params(w1, b1, w2, w3, b3, *, matmul_dtype=jnp.bfloat16):
    """One-time pad + cast of the parameters (call at init, reuse every forward).

    Hidden dims (d1, d2) are zero-padded to the 128-lane width (math stays exact:
    padded columns/rows contribute 0).  The input dim d0 and output dim d3 keep
    their true sizes so neither x nor the output needs per-call feature
    padding/slicing.  Matmul operands are cast to bf16 (MXU-native, halves
    weight DMA bytes); biases stay f32 for the VPU epilogues.
    """
    d0, d1 = w1.shape
    d2 = w2.shape[1]
    d3 = w3.shape[1]
    p1, p2 = _round_up(d1, _LANE), _round_up(d2, _LANE)

    def pad2(a, rows, cols, dtype):
        return jnp.pad(a, ((0, rows - a.shape[0]),
                           (0, cols - a.shape[1]))).astype(dtype)

    w1p = pad2(w1, d0, p1, matmul_dtype)
    w2p = pad2(w2, p1, p2, matmul_dtype)
    w3p = pad2(w3, p2, d3, matmul_dtype)
    b1p = pad2(b1.reshape(1, -1), 1, p1, jnp.float32)
    b3p = pad2(b3.reshape(1, -1), 1, d3, jnp.float32)
    return w1p, b1p, w2p, w3p, b3p


def _mlp_kernel(x_ref, w1_ref, b1_ref, w2_ref, w3_ref, b3_ref, o_ref):
    # f32 -> bf16 cast done in-kernel (cheap VPU pack hidden under MXU work);
    # avoids a separate wrapper-side cast pass over x in HBM.
    x = x_ref[...].astype(w1_ref.dtype)
    # layer1: x @ W1 (bf16 operands, f32 accumulation on the MXU) + b1, ReLU (f32 VPU)
    h1 = jnp.dot(x, w1_ref[...], preferred_element_type=jnp.float32)
    h1 = jnp.maximum(h1 + b1_ref[...], 0.0)
    # layer2: h1 @ W2 (no bias)
    h2 = jnp.dot(h1.astype(w2_ref.dtype), w2_ref[...],
                 preferred_element_type=jnp.float32)
    # layer3: h2 @ W3 + b3
    out = jnp.dot(h2.astype(w3_ref.dtype), w3_ref[...],
                  preferred_element_type=jnp.float32) + b3_ref[...]
    o_ref[...] = out.astype(o_ref.dtype)


def mlp_forward(x, params, *, max_batch_tile=512):
    """Fused forward pass.  `params` must come from prepare_params().

    x: (B, d0) f32.  Returns (B, d3) f32.
    """
    w1p, b1p, w2p, w3p, b3p = params
    B, d0 = x.shape
    assert d0 == w1p.shape[0], "x feature dim must match layer1 in_features"
    p1, p2, d3 = w1p.shape[1], w2p.shape[1], w3p.shape[1]

    tb, b_pad = _pick_batch_tile(B, max_batch_tile)
    # Padded batch rows produce ReLU(b1)-derived garbage; they are sliced off below.
    xp = x if b_pad == B else jnp.pad(x, ((0, b_pad - B), (0, 0)))
    grid = (b_pad // tb,)

    wsize = jnp.dtype(w1p.dtype).itemsize
    weight_bytes = (d0 * p1 + p1 * p2 + p2 * d3) * wsize + (p1 + d3) * 4
    step_bytes = tb * (d0 + d3) * 4                     # f32 x tile in + f32 out tile
    vmem_limit = _vmem_limit_bytes(2 * weight_bytes + 4 * step_bytes + (8 << 20))
    cost = pl.CostEstimate(
        flops=2 * b_pad * (d0 * p1 + p1 * p2 + p2 * d3),
        transcendentals=0,
        bytes_accessed=int(weight_bytes + b_pad * (d0 + d3) * 4),
    )

    # Weights/biases: constant index_map -> block index never changes across the
    # batch grid, so Pallas DMAs them only once (resident in VMEM).
    def wspec(rows, cols):
        return pl.BlockSpec((rows, cols), lambda i: (0, 0))

    # TODO(synk): add a K-tiled variant (grid over d1/d2 marked "arbitrary" with an
    # f32 accumulator scratch) once resident bf16 weights approach ~40-48 MiB on
    # v7x (64 MiB VMEM) or ~90-100 MiB on v5e/v6e (128 MiB VMEM).
    out_p = pl.pallas_call(
        _mlp_kernel,
        out_shape=jax.ShapeDtypeStruct((b_pad, d3), jnp.float32),
        grid_spec=pltpu.PrefetchScalarGridSpec(
            num_scalar_prefetch=0,
            grid=grid,
            in_specs=[
                pl.BlockSpec((tb, d0), lambda i: (i, 0)),   # batch tile of x (f32)
                wspec(d0, p1),                               # W1
                wspec(1, p1),                                # b1
                wspec(p1, p2),                               # W2
                wspec(p2, d3),                               # W3
                wspec(1, d3),                                # b3
            ],
            out_specs=pl.BlockSpec((tb, d3), lambda i: (i, 0)),
        ),
        compiler_params=pltpu.CompilerParams(
            dimension_semantics=("parallel",),
            vmem_limit_bytes=vmem_limit,
        ),
        cost_estimate=cost,
    )(xp, w1p, b1p, w2p, w3p, b3p)

    return out_p if b_pad == B else out_p[:B]


def init_params(key, layers):
    """Deterministic init mirroring PyTorch nn.Linear default U(-1/sqrt(fan_in), +)."""
    d0, d1, d2, d3 = layers
    k = jax.random.split(key, 5)

    def unif(kk, shape, fan_in):
        bound = 1.0 / jnp.sqrt(fan_in)
        return jax.random.uniform(kk, shape, jnp.float32, -bound, bound)

    # stored as (in, out) = PyTorch weight.T
    w1 = unif(k[0], (d0, d1), d0)
    b1 = unif(k[1], (1, d1), d0)
    w2 = unif(k[2], (d1, d2), d1)          # layer2 has no bias
    w3 = unif(k[3], (d2, d3), d2)
    b3 = unif(k[4], (1, d3), d2)
    return w1, b1, w2, w3, b3


if __name__ == "__main__":
    layers = [32, 64, 48, 16]   # [in, hidden1, hidden2, out]
    batch = 16

    key = jax.random.PRNGKey(0)
    kx, kp = jax.random.split(key)
    x = jax.random.normal(kx, (batch, layers[0]), jnp.float32)
    w1, b1, w2, w3, b3 = init_params(kp, layers)

    params = prepare_params(w1, b1, w2, w3, b3)     # one-time pad + cast
    fwd = jax.jit(mlp_forward)                      # hot path: exactly one pallas_call
    out = jax.block_until_ready(fwd(x, params))
    assert out.shape == (batch, layers[3])

    # Reference mirroring the kernel precision (bf16 operands, f32 accumulation).
    bf = jnp.bfloat16
    h1 = jnp.maximum(
        jnp.dot(x.astype(bf), w1.astype(bf), preferred_element_type=jnp.float32)
        + b1, 0.0)
    h2 = jnp.dot(h1.astype(bf), w2.astype(bf), preferred_element_type=jnp.float32)
    ref = jnp.dot(h2.astype(bf), w3.astype(bf),
                  preferred_element_type=jnp.float32) + b3
    assert jnp.allclose(out, ref, atol=1e-2, rtol=1e-2)

    # Loose sanity check against the full-f32 (PyTorch-semantics) reference.
    # TODO(synk): if bit-faithful f32 parity with torch.nn.Linear is required, call
    # prepare_params(..., matmul_dtype=jnp.float32) (dims here are tiny).
    ref32 = jnp.maximum(x @ w1 + b1, 0.0) @ w2 @ w3 + b3
    assert jnp.allclose(out, ref32, atol=1e-1, rtol=1e-1)

    print("KERNEL_OK")
</pallas_src>

<mosaic_0001>
module attributes {stable_mosaic.version = 11 : i64} {
  func.func @_mlp_kernel(%arg0: i32, %arg1: memref<16x32xf32, #tpu.memory_space<vmem>>, %arg2: memref<32x128xbf16, #tpu.memory_space<vmem>>, %arg3: memref<1x128xf32, #tpu.memory_space<vmem>>, %arg4: memref<128x128xbf16, #tpu.memory_space<vmem>>, %arg5: memref<128x16xbf16, #tpu.memory_space<vmem>>, %arg6: memref<1x16xf32, #tpu.memory_space<vmem>>, %arg7: memref<16x16xf32, #tpu.memory_space<vmem>>) attributes {dimension_semantics = [#tpu.dimension_semantics<parallel>], iteration_bounds = array<i64: 1>, scalar_prefetch = 0 : i64, scratch_operands = 0 : i64, tpu.core_type = #tpu.core_type<tc>, window_params = [{transform_indices = @transform_0, window_bounds = array<i64: 16, 32>}, {pipeline_mode = #tpu.pipeline_mode<synchronous>, transform_indices = @transform_1, window_bounds = array<i64: 32, 128>}, {pipeline_mode = #tpu.pipeline_mode<synchronous>, transform_indices = @transform_2, window_bounds = array<i64: 1, 128>}, {pipeline_mode = #tpu.pipeline_mode<synchronous>, transform_indices = @transform_3, window_bounds = array<i64: 128, 128>}, {pipeline_mode = #tpu.pipeline_mode<synchronous>, transform_indices = @transform_4, window_bounds = array<i64: 128, 16>}, {pipeline_mode = #tpu.pipeline_mode<synchronous>, transform_indices = @transform_5, window_bounds = array<i64: 1, 16>}, {transform_indices = @transform_6, window_bounds = array<i64: 16, 16>}]} {
    %c0 = arith.constant 0 : index
    %c0_0 = arith.constant 0 : index
    %0 = vector.load %arg1[%c0, %c0_0] : memref<16x32xf32, #tpu.memory_space<vmem>>, vector<16x32xf32>
    %1 = arith.truncf %0 : vector<16x32xf32> to vector<16x32xbf16>
    %c0_1 = arith.constant 0 : index
    %c0_2 = arith.constant 0 : index
    %2 = vector.load %arg2[%c0_1, %c0_2] : memref<32x128xbf16, #tpu.memory_space<vmem>>, vector<32x128xbf16>
    %cst = arith.constant dense<0.000000e+00> : vector<16x128xf32>
    %3 = tpu.matmul %1, %2, %cst {dimension_numbers = #tpu.dot_dimension_numbers<[1], [0], [0], [1], [0, 0, 1, 1], [], []>} : vector<16x32xbf16>, vector<32x128xbf16>, vector<16x128xf32> -> vector<16x128xf32>
    %c0_3 = arith.constant 0 : index
    %c0_4 = arith.constant 0 : index
    %4 = vector.load %arg3[%c0_3, %c0_4] : memref<1x128xf32, #tpu.memory_space<vmem>>, vector<1x128xf32>
    %5 = vector.broadcast %4 : vector<1x128xf32> to vector<16x128xf32>
    %6 = arith.addf %3, %5 : vector<16x128xf32>
    %cst_5 = arith.constant 0.000000e+00 : f32
    %7 = vector.broadcast %cst_5 : f32 to vector<16x128xf32>
    %8 = arith.maximumf %6, %7 : vector<16x128xf32>
    %9 = arith.truncf %8 : vector<16x128xf32> to vector<16x128xbf16>
    %c0_6 = arith.constant 0 : index
    %c0_7 = arith.constant 0 : index
    %10 = vector.load %arg4[%c0_6, %c0_7] : memref<128x128xbf16, #tpu.memory_space<vmem>>, vector<128x128xbf16>
    %cst_8 = arith.constant dense<0.000000e+00> : vector<16x128xf32>
    %11 = tpu.matmul %9, %10, %cst_8 {dimension_numbers = #tpu.dot_dimension_numbers<[1], [0], [0], [1], [0, 0, 1, 1], [], []>} : vector<16x128xbf16>, vector<128x128xbf16>, vector<16x128xf32> -> vector<16x128xf32>
    %12 = arith.truncf %11 : vector<16x128xf32> to vector<16x128xbf16>
    %c0_9 = arith.constant 0 : index
    %c0_10 = arith.constant 0 : index
    %13 = vector.load %arg5[%c0_9, %c0_10] : memref<128x16xbf16, #tpu.memory_space<vmem>>, vector<128x16xbf16>
    %cst_11 = arith.constant dense<0.000000e+00> : vector<16x16xf32>
    %14 = tpu.matmul %12, %13, %cst_11 {dimension_numbers = #tpu.dot_dimension_numbers<[1], [0], [0], [1], [0, 0, 1, 1], [], []>} : vector<16x128xbf16>, vector<128x16xbf16>, vector<16x16xf32> -> vector<16x16xf32>
    %c0_12 = arith.constant 0 : index
    %c0_13 = arith.constant 0 : index
    %15 = vector.load %arg6[%c0_12, %c0_13] : memref<1x16xf32, #tpu.memory_space<vmem>>, vector<1x16xf32>
    %16 = vector.broadcast %15 : vector<1x16xf32> to vector<16x16xf32>
    %17 = arith.addf %14, %16 : vector<16x16xf32>
    %c0_14 = arith.constant 0 : index
    %c0_15 = arith.constant 0 : index
    %18 = vector.load %arg7[%c0_14, %c0_15] : memref<16x16xf32, #tpu.memory_space<vmem>>, vector<16x16xf32>
    tpu.vector_store %arg7[%c0_14, %c0_15], %17 {strides = array<i32>} : memref<16x16xf32, #tpu.memory_space<vmem>>, vector<16x16xf32>,
    return
  }
  func.func @transform_0(%arg0: i32) -> (i32, i32) {
    %c0_i32 = arith.constant 0 : i32
    %c0_i32_0 = arith.constant 0 : i32
    return %arg0, %c0_i32 : i32, i32
  }
  func.func @transform_1(%arg0: i32) -> (i32, i32) {
    %c0_i32 = arith.constant 0 : i32
    %c0_i32_0 = arith.constant 0 : i32
    %c0_i32_1 = arith.constant 0 : i32
    return %c0_i32, %c0_i32_0 : i32, i32
  }
  func.func @transform_2(%arg0: i32) -> (i32, i32) {
    %c0_i32 = arith.constant 0 : i32
    %c0_i32_0 = arith.constant 0 : i32
    %c0_i32_1 = arith.constant 0 : i32
    return %c0_i32, %c0_i32_0 : i32, i32
  }
  func.func @transform_3(%arg0: i32) -> (i32, i32) {
    %c0_i32 = arith.constant 0 : i32
    %c0_i32_0 = arith.constant 0 : i32
    %c0_i32_1 = arith.constant 0 : i32
    return %c0_i32, %c0_i32_0 : i32, i32
  }
  func.func @transform_4(%arg0: i32) -> (i32, i32) {
    %c0_i32 = arith.constant 0 : i32
    %c0_i32_0 = arith.constant 0 : i32
    %c0_i32_1 = arith.constant 0 : i32
    return %c0_i32, %c0_i32_0 : i32, i32
  }
  func.func @transform_5(%arg0: i32) -> (i32, i32) {
    %c0_i32 = arith.constant 0 : i32
    %c0_i32_0 = arith.constant 0 : i32
    %c0_i32_1 = arith.constant 0 : i32
    return %c0_i32, %c0_i32_0 : i32, i32
  }
  func.func @transform_6(%arg0: i32) -> (i32, i32) {
    %c0_i32 = arith.constant 0 : i32
    %c0_i32_0 = arith.constant 0 : i32
    return %arg0, %c0_i32 : i32, i32
  }
}

</mosaic_0001>

<llo_original>
// kernel: mlp_forward.1
$region0: #{mlp_forward.1}
  #allocation0 [shape = 'u32[]', space=smem, size = 0x4, offset = 0x4, fixed_abs, tag = 'smem constant byte address 0x4 - core index']
  #allocation1 [shape = 'u32[144,128]{1,0:T(1,128)}', space=vmem, size = 0x12000, scoped, tag = 'internal scratch']
  %s0 = inlined_call_operand.vmem [shape: f32[16,32], index: 0, kind: input, shape index: {}]
  %s1 = inlined_call_operand.hbm [shape: bf16[32,128], index: 1, kind: input, shape index: {}]
  %s2 = inlined_call_operand.vmem [shape: f32[1,128], index: 2, kind: input, shape index: {}]
  %s3 = inlined_call_operand.vmem [shape: bf16[128,128], index: 3, kind: input, shape index: {}]
  %s4 = inlined_call_operand.vmem [shape: bf16[128,16], index: 4, kind: input, shape index: {}]
  %s5 = inlined_call_operand.vmem [shape: f32[1,16], index: 5, kind: input, shape index: {}]
  %s6 = inlined_call_operand.hbm [shape: f32[16,16], index: 6, kind: output, shape index: {}]
  %s7 = sld [smem:[#allocation0]]
  $region38: #{mlp_forward.1} parent=0
    _
  %s9 = ssub.s32 1, %s7
  %s10 = scalar_select 0, %s9, %s7
  $region1: #{mlp_forward.1} parent=0
    #allocation2 [shape = 'u8[8192]{0}', space=vmem, size = 0x2000, scoped, tag = 'input window, operand 1, single buffered']
    #allocation3 [shape = 's32[1]{0}', space=sflag, size = 0x4, scoped, tag = 'scoped memory for mlp_forward.1']
    #allocation4 [shape = 's32[1]{0}', space=sflag, size = 0x4, scoped, tag = 'scoped memory for mlp_forward.1']
    #allocation5 [shape = 'u8[8192]{0}', space=vmem, size = 0x2000, scoped, tag = 'output window, operand 0, single buffered']
    %11 = vsyncpa [#allocation3], 0
    %12 = vsyncpa [#allocation4], 0
    // Predicated region
    $region2: #{mlp_forward.1} parent=1 // pred_check
      _
    $region3: #{mlp_forward.1} parent=1 // pred_check_branch
      %14 = sbr.rel (0) target = $region5
    $region4: #{mlp_forward.1} parent=1 // pred_region
      _
    $region5: #{mlp_forward.1} parent=1 // pred_fallthru
      _
    // Predicated region
    $region6: #{mlp_forward.1} parent=1 // pred_check
      _
    $region7: #{mlp_forward.1} parent=1 // pred_check_branch
      %16 = sbr.rel (0) target = $region9
    $region8: #{mlp_forward.1} parent=1 // pred_region
      %s18 = ssub.s32 256, 256
      %19 = vsyncadd [#allocation3], %s18
      %s20 = sshll.u32 [#allocation2], 4
      %s21 = int_to_ptr.vmem [resolvable:$true] %s20
      %26 = dma.hbm_to_vmem [thread:$0]  %s1, 256, %s21, [#allocation3], 64, 64, 4
    $region9: #{mlp_forward.1} parent=1 // pred_fallthru
      _
    // Predicated region
    $region10: #{mlp_forward.1} parent=1 // pred_check
      _
    $region11: #{mlp_forward.1} parent=1 // pred_check_branch
      %28 = sbr.rel (0) target = $region13
    $region12: #{mlp_forward.1} parent=1 // pred_region
      _
    $region13: #{mlp_forward.1} parent=1 // pred_fallthru
      _
    // Predicated region
    $region14: #{mlp_forward.1} parent=1 // pred_check
      _
    $region15: #{mlp_forward.1} parent=1 // pred_check_branch
      %30 = sbr.rel (0) target = $region17
    $region16: #{mlp_forward.1} parent=1 // pred_region
      _
    $region17: #{mlp_forward.1} parent=1 // pred_fallthru
      _
    // Predicated region
    $region18: #{mlp_forward.1} parent=1 // pred_check
      _
    $region19: #{mlp_forward.1} parent=1 // pred_check_branch
      %32 = sbr.rel (0) target = $region21
    $region20: #{mlp_forward.1} parent=1 // pred_region
      _
    $region21: #{mlp_forward.1} parent=1 // pred_fallthru
      _
    // Predicated region
    $region22: #{mlp_forward.1} parent=1 // pred_check
      _
    $region23: #{mlp_forward.1} parent=1 // pred_check_branch
      %34 = sbr.rel (0) target = $region25
    $region24: #{mlp_forward.1} parent=1 // pred_region
      _
    $region25: #{mlp_forward.1} parent=1 // pred_fallthru
      _
    // Predicated region
    $region26: #{mlp_forward.1} parent=1 // pred_check
      _
    $region27: #{mlp_forward.1} parent=1 // pred_check_branch
      %36 = sbr.rel (0) target = $region29
    $region28: #{mlp_forward.1} parent=1 // pred_region
      %37 = dma.done [#allocation3], 256
    $region29: #{mlp_forward.1} parent=1 // pred_fallthru
      _
    %v39 = vld [vmem:[%s0] sm:$0xff]
    %v40 = vld [vmem:[%s0 + $0x8] sm:$0xff]
    %v41 = vpack.c.bf16 %v40, %v39
    %v42 = vld [vmem:[#allocation2] sm:$0xf]
    %v43 = vld [vmem:[#allocation2 + $0x4] sm:$0xf]
    %v44 = vld [vmem:[#allocation2 + $0x8] sm:$0xf]
    %v45 = vld [vmem:[#allocation2 + $0xc] sm:$0xf]
    %v46 = vld [vmem:[%s2] sm:$0x1]
    %v48 = vlaneseq
    %v49 = vshrl.u32 %v48, 7
    %v50 = vsub.s32 0, %v49
    %v51 = vrot.slane %v46, %v50
    %v57 = vunpack.c.l.b16 %v42
    %v58 = vunpack.c.l.b16 %v43
    %v59 = vunpack.c.l.b16 %v44
    %v60 = vunpack.c.l.b16 %v45
    %v61 = vpack.c.b16 %v58, %v57
    %v62 = vpack.c.b16 %v60, %v59
    %vm65 = vcmask 261120
    %v67 = vsel %vm65, %v41, 0
    %69 = vmatprep.subr.bf16.mxu0 0
    %70 = vmatpush1.bf16.msra.mxu0 %v61
    %71 = vmatprep.subr.bf16.mxu0 0
    %72 = vmatpush1.bf16.msra.mxu0 %v62
    %73 = vmatprep.subr.bf16.mxu0 0
    %74 = vmatpush1.bf16.msra.mxu0 0
    %75 = vmatprep.subr.bf16.mxu0 0
    %76 = vmatpush1.bf16.msra.mxu0 0
    %77 = vmatprep.subr.bf16.mxu0 0
    %78 = vmatpush1.bf16.msra.mxu0 0
    %79 = vmatprep.subr.bf16.mxu0 0
    %80 = vmatpush1.bf16.msra.mxu0 0
    %81 = vmatprep.subr.bf16.mxu0 0
    %82 = vmatpush1.bf16.msra.mxu0 0
    %83 = vmatprep.subr.bf16.mxu0 0
    %84 = vmatpush1.bf16.msra.mxu0 0
    %85 = vmatprep.subr.bf16.mxu0 0
    %86 = vmatpush1.bf16.msra.mxu0 0
    %87 = vmatprep.subr.bf16.mxu0 0
    %88 = vmatpush1.bf16.msra.mxu0 0
    %89 = vmatprep.subr.bf16.mxu0 0
    %90 = vmatpush1.bf16.msra.mxu0 0
    %91 = vmatprep.subr.bf16.mxu0 0
    %92 = vmatpush1.bf16.msra.mxu0 0
    %93 = vmatprep.subr.bf16.mxu0 0
    %94 = vmatpush1.bf16.msra.mxu0 0
    %95 = vmatprep.subr.bf16.mxu0 0
    %96 = vmatpush1.bf16.msra.mxu0 0
    %97 = vmatprep.subr.bf16.mxu0 0
    %98 = vmatpush1.bf16.msra.mxu0 0
    %99 = vmatprep.subr.bf16.mxu0 0
    %100 = vmatpush1.bf16.msra.mxu0 0
    %101 = vmatprep.mubr.bf16.mxu0 0
    %102 = vmatmul.mubr.bf16.gmra.mrb[0].mxu0 %v67
    %v103 = vpop.f32.mrb[0].mxu0
    %v104 = vadd.f32 %v51, %v103
    %v105 = vpop.f32.mrb[0].mxu0
    %v106 = vpop.f32.mrb[0].mxu0
    %v107 = vadd.f32 %v51, %v106
    %v108 = vpop.f32.mrb[0].mxu0
    %109 = vdwg.mxu0
    %v110 = vmax.f32 %v104, 0.0
    %v111 = vmax.f32 %v107, 0.0
    %v112 = vpack.c.bf16 %v111, %v110
    %v113 = vld [vmem:[%s3] sm:$0xf]
    %v114 = vld [vmem:[%s3 + $0x4] sm:$0xf]
    %v115 = vld [vmem:[%s3 + $0x8] sm:$0xf]
    %v116 = vld [vmem:[%s3 + $0xc] sm:$0xf]
    %v117 = vld [vmem:[%s3 + $0x10] sm:$0xf]
    %v118 = vld [vmem:[%s3 + $0x14] sm:$0xf]
    %v119 = vld [vmem:[%s3 + $0x18] sm:$0xf]
    %v120 = vld [vmem:[%s3 + $0x1c] sm:$0xf]
    %v121 = vld [vmem:[%s3 + $0x20] sm:$0xf]
    %v122 = vld [vmem:[%s3 + $0x24] sm:$0xf]
    %v123 = vld [vmem:[%s3 + $0x28] sm:$0xf]
    %v124 = vld [vmem:[%s3 + $0x2c] sm:$0xf]
    %v125 = vld [vmem:[%s3 + $0x30] sm:$0xf]
    %v126 = vld [vmem:[%s3 + $0x34] sm:$0xf]
    %v127 = vld [vmem:[%s3 + $0x38] sm:$0xf]
    %v128 = vld [vmem:[%s3 + $0x3c] sm:$0xf]
    %v145 = vunpack.c.l.b16 %v113
    %v146 = vunpack.c.l.b16 %v114
    %v147 = vunpack.c.l.b16 %v115
    %v148 = vunpack.c.l.b16 %v116
    %v149 = vunpack.c.l.b16 %v117
    %v150 = vunpack.c.l.b16 %v118
    %v151 = vunpack.c.l.b16 %v119
    %v152 = vunpack.c.l.b16 %v120
    %v153 = vunpack.c.l.b16 %v121
    %v154 = vunpack.c.l.b16 %v122
    %v155 = vunpack.c.l.b16 %v123
    %v156 = vunpack.c.l.b16 %v124
    %v157 = vunpack.c.l.b16 %v125
    %v158 = vunpack.c.l.b16 %v126
    %v159 = vunpack.c.l.b16 %v127
    %v160 = vunpack.c.l.b16 %v128
    %v161 = vpack.c.b16 %v146, %v145
    %v162 = vpack.c.b16 %v148, %v147
    %v163 = vpack.c.b16 %v150, %v149
    %v164 = vpack.c.b16 %v152, %v151
    %v165 = vpack.c.b16 %v154, %v153
    %v166 = vpack.c.b16 %v156, %v155
    %v167 = vpack.c.b16 %v158, %v157
    %v168 = vpack.c.b16 %v160, %v159
    %177 = vmatprep.subr.bf16.mxu0 0
    %178 = vmatpush1.bf16.msra.mxu0 %v161
    %179 = vmatprep.subr.bf16.mxu0 0
    %180 = vmatpush1.bf16.msra.mxu0 %v162
    %181 = vmatprep.subr.bf16.mxu0 0
    %182 = vmatpush1.bf16.msra.mxu0 %v163
    %183 = vmatprep.subr.bf16.mxu0 0
    %184 = vmatpush1.bf16.msra.mxu0 %v164
    %185 = vmatprep.subr.bf16.mxu0 0
    %186 = vmatpush1.bf16.msra.mxu0 %v165
    %187 = vmatprep.subr.bf16.mxu0 0
    %188 = vmatpush1.bf16.msra.mxu0 %v166
    %189 = vmatprep.subr.bf16.mxu0 0
    %190 = vmatpush1.bf16.msra.mxu0 %v167
    %191 = vmatprep.subr.bf16.mxu0 0
    %192 = vmatpush1.bf16.msra.mxu0 %v168
    %193 = vmatprep.subr.bf16.mxu0 0
    %194 = vmatpush1.bf16.msra.mxu0 0
    %195 = vmatprep.subr.bf16.mxu0 0
    %196 = vmatpush1.bf16.msra.mxu0 0
    %197 = vmatprep.subr.bf16.mxu0 0
    %198 = vmatpush1.bf16.msra.mxu0 0
    %199 = vmatprep.subr.bf16.mxu0 0
    %200 = vmatpush1.bf16.msra.mxu0 0
    %201 = vmatprep.subr.bf16.mxu0 0
    %202 = vmatpush1.bf16.msra.mxu0 0
    %203 = vmatprep.subr.bf16.mxu0 0
    %204 = vmatpush1.bf16.msra.mxu0 0
    %205 = vmatprep.subr.bf16.mxu0 0
    %206 = vmatpush1.bf16.msra.mxu0 0
    %207 = vmatprep.subr.bf16.mxu0 0
    %208 = vmatpush1.bf16.msra.mxu0 0
    %209 = vmatprep.mubr.bf16.mxu0 0
    %210 = vmatmul.mubr.bf16.gmra.mrb[0].mxu0 %v112
    %v211 = vpop.f32.mrb[0].mxu0
    %v212 = vadd.f32 0.0, %v211
    %v213 = vpop.f32.mrb[0].mxu0
    %v214 = vpop.f32.mrb[0].mxu0
    %v215 = vadd.f32 0.0, %v214
    %v216 = vpop.f32.mrb[0].mxu0
    %217 = vdwg.mxu0
    %v218 = vpack.c.bf16 %v215, %v212
    %v219 = vld [vmem:[%s4] sm:$0xf]
    %v220 = vld [vmem:[%s4 + $0x4] sm:$0xf]
    %v221 = vld [vmem:[%s4 + $0x8] sm:$0xf]
    %v222 = vld [vmem:[%s4 + $0xc] sm:$0xf]
    %v223 = vld [vmem:[%s4 + $0x10] sm:$0xf]
    %v224 = vld [vmem:[%s4 + $0x14] sm:$0xf]
    %v225 = vld [vmem:[%s4 + $0x18] sm:$0xf]
    %v226 = vld [vmem:[%s4 + $0x1c] sm:$0xf]
    %v227 = vld [vmem:[%s4 + $0x20] sm:$0xf]
    %v228 = vld [vmem:[%s4 + $0x24] sm:$0xf]
    %v229 = vld [vmem:[%s4 + $0x28] sm:$0xf]
    %v230 = vld [vmem:[%s4 + $0x2c] sm:$0xf]
    %v231 = vld [vmem:[%s4 + $0x30] sm:$0xf]
    %v232 = vld [vmem:[%s4 + $0x34] sm:$0xf]
    %v233 = vld [vmem:[%s4 + $0x38] sm:$0xf]
    %v234 = vld [vmem:[%s4 + $0x3c] sm:$0xf]
    %v235 = vld [vmem:[%s5] sm:$0x1]
    %v237 = vlaneseq
    %v238 = vshrl.u32 %v237, 7
    %v239 = vsub.s32 0, %v238
    %v240 = vrot.slane %v235, %v239
    %v258 = vunpack.c.l.b16 %v219
    %v259 = vunpack.c.l.b16 %v220
    %v260 = vunpack.c.l.b16 %v221
    %v261 = vunpack.c.l.b16 %v222
    %v262 = vunpack.c.l.b16 %v223
    %v263 = vunpack.c.l.b16 %v224
    %v264 = vunpack.c.l.b16 %v225
    %v265 = vunpack.c.l.b16 %v226
    %v266 = vunpack.c.l.b16 %v227
    %v267 = vunpack.c.l.b16 %v228
    %v268 = vunpack.c.l.b16 %v229
    %v269 = vunpack.c.l.b16 %v230
    %v270 = vunpack.c.l.b16 %v231
    %v271 = vunpack.c.l.b16 %v232
    %v272 = vunpack.c.l.b16 %v233
    %v273 = vunpack.c.l.b16 %v234
    %v274 = vpack.c.b16 %v259, %v258
    %v275 = vpack.c.b16 %v261, %v260
    %v276 = vpack.c.b16 %v263, %v262
    %v277 = vpack.c.b16 %v265, %v264
    %v278 = vpack.c.b16 %v267, %v266
    %v279 = vpack.c.b16 %v269, %v268
    %v280 = vpack.c.b16 %v271, %v270
    %v281 = vpack.c.b16 %v273, %v272
    %290 = vmatprep.subr.bf16.mxu0 0
    %291 = vmatpush1.bf16.msra.mxu0 %v274
    %292 = vmatprep.subr.bf16.mxu0 0
    %293 = vmatpush1.bf16.msra.mxu0 %v275
    %294 = vmatprep.subr.bf16.mxu0 0
    %295 = vmatpush1.bf16.msra.mxu0 %v276
    %296 = vmatprep.subr.bf16.mxu0 0
    %297 = vmatpush1.bf16.msra.mxu0 %v277
    %298 = vmatprep.subr.bf16.mxu0 0
    %299 = vmatpush1.bf16.msra.mxu0 %v278
    %300 = vmatprep.subr.bf16.mxu0 0
    %301 = vmatpush1.bf16.msra.mxu0 %v279
    %302 = vmatprep.subr.bf16.mxu0 0
    %303 = vmatpush1.bf16.msra.mxu0 %v280
    %304 = vmatprep.subr.bf16.mxu0 0
    %305 = vmatpush1.bf16.msra.mxu0 %v281
    %306 = vmatprep.subr.bf16.mxu0 0
    %307 = vmatpush1.bf16.msra.mxu0 0
    %308 = vmatprep.subr.bf16.mxu0 0
    %309 = vmatpush1.bf16.msra.mxu0 0
    %310 = vmatprep.subr.bf16.mxu0 0
    %311 = vmatpush1.bf16.msra.mxu0 0
    %312 = vmatprep.subr.bf16.mxu0 0
    %313 = vmatpush1.bf16.msra.mxu0 0
    %314 = vmatprep.subr.bf16.mxu0 0
    %315 = vmatpush1.bf16.msra.mxu0 0
    %316 = vmatprep.subr.bf16.mxu0 0
    %317 = vmatpush1.bf16.msra.mxu0 0
    %318 = vmatprep.subr.bf16.mxu0 0
    %319 = vmatpush1.bf16.msra.mxu0 0
    %320 = vmatprep.subr.bf16.mxu0 0
    %321 = vmatpush1.bf16.msra.mxu0 0
    %322 = vmatprep.mubr.bf16.mxu0 0
    %323 = vmatmul.mubr.bf16.gmra.mrb[0].mxu0 %v218
    %v324 = vpop.f32.mrb[0].mxu0
    %v325 = vadd.f32 %v240, %v324
    %v326 = vpop.f32.mrb[0].mxu0
    %v327 = vpop.f32.mrb[0].mxu0
    %v328 = vadd.f32 %v240, %v327
    %v329 = vpop.f32.mrb[0].mxu0
    %330 = vdwg.mxu0
    %vm331 = vcmask 130048
    %332 = vst.msk [vmem:[#allocation5] sm:$0xff] %vm331, %v325
    %333 = vst.msk [vmem:[#allocation5 + $0x8] sm:$0xff] %vm331, %v328
    // Predicated region
    $region30: #{mlp_forward.1} parent=1 // pred_check
      _
    $region31: #{mlp_forward.1} parent=1 // pred_check_branch
      %335 = sbr.rel (0) target = $region33
    $region32: #{mlp_forward.1} parent=1 // pred_region
      %s337 = ssub.s32 256, 256
      %338 = vsyncadd [#allocation4], %s337
      %s339 = sshll.u32 [#allocation5], 4
      %s340 = int_to_ptr.vmem [resolvable:$true] %s339
      %345 = dma.vmem_to_hbm [thread:$0]  %s340, 256, %s6, [#allocation4], 128, 128, 8
    $region33: #{mlp_forward.1} parent=1 // pred_fallthru
      _
    // Predicated region
    $region34: #{mlp_forward.1} parent=1 // pred_check
      _
    $region35: #{mlp_forward.1} parent=1 // pred_check_branch
      %347 = sbr.rel (0) target = $region37
    $region36: #{mlp_forward.1} parent=1 // pred_region
      %348 = dma.done [#allocation4], 256
    $region37: #{mlp_forward.1} parent=1 // pred_fallthru
      _
    %349 = vsyncpa [#allocation3], 1
    %350 = vsyncpa [#allocation4], 1

</llo_original>
